<compile_context>
chip_gen: v6e
topology: v6e:2x2x1
jax: 0.10.0
libtpu: 0.0.40
codegen_flags: <defaults>
</compile_context>

<pallas_src>
import functools

import jax
import jax.numpy as jnp
from jax.experimental import pallas as pl
from jax.experimental.pallas import tpu as pltpu

EPS = 1e-6
LEAD = 128          # leading flat halo (lanes): pixel region starts 128-lane aligned


def _round_up(x, m):
    return (x + m - 1) // m * m


# --------------------------------------------------------------------------------------
# Fused Pallas kernel: (conv3x3 -> channels_first LayerNorm -> ReLU) x 2, B images/step
# --------------------------------------------------------------------------------------
def _vgg_block_kernel(x_ref, w1_ref, w2_ref, ln_ref, mask_ref, out_ref, y1_scr, *,
                      Wp, PB, eps):
    # Layouts (per grid step):
    #   x_ref   : (B, Cin, Lbig)   channels in sublanes, flattened zero-haloed padded-grid
    #                              pixels in lanes; pixel region starts at lane LEAD
    #   w1_ref  : (Cout, 9*Cin)    tap-stacked conv1 weights (column block t = ky*3+kx)
    #   w2_ref  : (Cout, 9*Cout)   tap-stacked conv2 weights
    #   ln_ref  : (Cout, 4)        columns = [gamma1, beta1, gamma2, beta2] (f32)
    #   mask_ref: (1, PB)          1.0 on interior pixels of the padded grid, else 0.0
    #   out_ref : (B, Cout, PB)    lane-dense padded-grid output (host slices interior)
    #   y1_scr  : (Cout, Lbig)     VMEM intermediate, same flat-halo convention as x
    B = x_ref.shape[0]
    Cout = out_ref.shape[1]
    Lbig = y1_scr.shape[1]
    base = LEAD - (Wp + 1)            # flat offset of tap (ky=0, kx=0)

    # Zero only the two flat-halo strips; the pixel block [LEAD, LEAD+PB) is fully
    # overwritten every image.  Done every step on purpose: a program_id()==0 guard
    # breaks under megacore grid sharding (second core's scratch never initialized).
    y1_scr[:, :LEAD] = jnp.zeros((Cout, LEAD), y1_scr.dtype)
    y1_scr[:, LEAD + PB:] = jnp.zeros((Cout, Lbig - LEAD - PB), y1_scr.dtype)

    mask = mask_ref[...]                                    # (1, PB) f32
    g1, b1 = ln_ref[:, 0:1], ln_ref[:, 1:2]                 # (Cout, 1) f32
    g2, b2 = ln_ref[:, 2:3], ln_ref[:, 3:4]

    def stacked_rhs(load):
        # K-stack the 9 taps along the contraction axis -> ONE matmul per stage.
        return jnp.concatenate(
            [load(base + ky * Wp + kx) for ky in range(3) for kx in range(3)], axis=0)

    def ln_relu(y, g, b):
        # channels_first LayerNorm (biased variance) over the channel (sublane) axis + ReLU
        u = jnp.mean(y, axis=0, keepdims=True)
        d = y - u
        s = jnp.mean(d * d, axis=0, keepdims=True)
        return jnp.maximum(d * jax.lax.rsqrt(s + eps) * g + b, 0.0)

    for img in range(B):                                    # small static unrolled loop
        # ---- stage 1: conv1 -> LN1 -> ReLU (mask doubles as conv2's zero padding) ----
        rhs1 = stacked_rhs(lambda off: x_ref[img, :, off:off + PB])      # (9*Cin, PB)
        y1 = jnp.dot(w1_ref[...], rhs1, preferred_element_type=jnp.float32)
        y1 = ln_relu(y1, g1, b1) * mask
        y1_scr[:, LEAD:LEAD + PB] = y1.astype(y1_scr.dtype)  # 128-aligned, unmasked store

        # ---- stage 2: conv2 -> LN2 -> ReLU ----
        rhs2 = stacked_rhs(lambda off: y1_scr[:, off:off + PB])          # (9*Cout, PB)
        y2 = jnp.dot(w2_ref[...], rhs2, preferred_element_type=jnp.float32)
        y2 = ln_relu(y2, g2, b2) * mask

        # single lane-dense (Cout, PB) store; host extracts the H*W interior
        out_ref[img] = y2.astype(out_ref.dtype)


# --------------------------------------------------------------------------------------
# Wrapper: layout prep (pad + reshape only, no transposes, no im2col) + pallas_call
# --------------------------------------------------------------------------------------
def _images_per_step(n):
    # Amortize per-step overhead while keeping >= 2 grid steps (v7x megacore) when possible.
    for b in (8, 4, 2):
        if n % b == 0 and n // b >= 2:
            return b
    return 1


def vgg_block_forward(x_nchw, params, *, compute_dtype=jnp.bfloat16, images_per_step=None):
    """Pallas VGGBlock forward.  x_nchw: (N, Cin, H, W) f32 -> (N, Cout, H, W) f32."""
    N, Cin, H, W = map(int, x_nchw.shape)
    Cout = int(params["w1"].shape[0])
    Hp, Wp = H + 2, W + 2
    P = Hp * Wp                                  # padded-grid pixel count
    PB = _round_up(P, 128)                       # lane-dense pixel block (3 vregs @ 16x16)
    Lbig = _round_up(LEAD + Wp + 1 + PB, 128)    # flat buffer with leading/trailing halos
    B = images_per_step if images_per_step is not None else _images_per_step(N)
    assert N % B == 0, (N, B)

    # Input: NCHW -> spatial zero pad -> flatten pixels -> flat halo pad (1x HBM traffic).
    xp = jnp.pad(x_nchw, ((0, 0), (0, 0), (1, 1), (1, 1)))           # (N, Cin, Hp, Wp)
    xb = jnp.pad(xp.reshape(N, Cin, P), ((0, 0), (0, 0), (LEAD, Lbig - LEAD - P)))
    xb = xb.astype(compute_dtype)                                    # (N, Cin, Lbig)

    def stack_taps(w):
        # (Cout, Cin, 3, 3) -> (Cout, 9*Cin) with column block t = ky*3+kx = w[:, :, ky, kx]
        co, ci = int(w.shape[0]), int(w.shape[1])
        return jnp.transpose(w, (0, 2, 3, 1)).reshape(co, 9 * ci).astype(compute_dtype)

    w1t, w2t = stack_taps(params["w1"]), stack_taps(params["w2"])
    ln = jnp.stack([params["g1"], params["b1"], params["g2"], params["b2"]],
                   axis=1).astype(jnp.float32)                       # (Cout, 4)

    # Interior-pixel mask on the padded flat grid (also zeroes the PB-P pad lanes).
    pix = jnp.arange(PB, dtype=jnp.int32)
    ii, jj = pix // Wp, pix % Wp
    mask = ((pix < P) & (ii >= 1) & (ii <= H) & (jj >= 1) & (jj <= W))
    mask = mask.astype(jnp.float32).reshape(1, PB)

    kernel = functools.partial(_vgg_block_kernel, Wp=Wp, PB=PB, eps=EPS)

    isz = jnp.dtype(compute_dtype).itemsize
    cost = pl.CostEstimate(
        flops=int(2 * 9 * N * PB * Cout * (Cin + Cout)),
        transcendentals=int(2 * N * PB),
        bytes_accessed=int(xb.size * isz + (w1t.size + w2t.size) * isz
                           + N * Cout * PB * 4),
    )

    out = pl.pallas_call(
        kernel,
        out_shape=jax.ShapeDtypeStruct((N, Cout, PB), jnp.float32),
        grid=(N // B,),
        in_specs=[
            pl.BlockSpec((B, Cin, Lbig), lambda n: (n, 0, 0)),       # x (B images / step)
            pl.BlockSpec((Cout, 9 * Cin), lambda n: (0, 0)),         # conv1 taps (K-stacked)
            pl.BlockSpec((Cout, 9 * Cout), lambda n: (0, 0)),        # conv2 taps (K-stacked)
            pl.BlockSpec((Cout, 4), lambda n: (0, 0)),               # [g1 b1 g2 b2]
            pl.BlockSpec((1, PB), lambda n: (0, 0)),                 # interior mask
        ],
        out_specs=pl.BlockSpec((B, Cout, PB), lambda n: (n, 0, 0)),
        scratch_shapes=[pltpu.VMEM((Cout, Lbig), compute_dtype)],
        compiler_params=pltpu.CompilerParams(dimension_semantics=("parallel",)),
        cost_estimate=cost,
    )(xb, w1t, w2t, ln, mask)

    # Free reshape + small interior slice (the padded layout could instead be fed
    # directly to a following VGG block as the interchange format).
    return out[:, :, :P].reshape(N, Cout, Hp, Wp)[:, :, 1:H + 1, 1:W + 1]


# --------------------------------------------------------------------------------------
# Pure-JAX reference (matches the PyTorch module); compute_dtype mirrors the kernel's
# matmul-operand precision so the bf16 path can be checked tightly.
# --------------------------------------------------------------------------------------
def ref_forward(x_nchw, params, compute_dtype=jnp.float32):
    def conv(x, w):
        return jax.lax.conv_general_dilated(
            x.astype(compute_dtype), w.astype(compute_dtype),
            window_strides=(1, 1), padding="SAME",
            dimension_numbers=("NCHW", "OIHW", "NCHW"),
            preferred_element_type=jnp.float32)

    def ln_cf(x, g, b):
        u = jnp.mean(x, axis=1, keepdims=True)
        s = jnp.mean((x - u) ** 2, axis=1, keepdims=True)
        xn = (x - u) * jax.lax.rsqrt(s + EPS)
        return g[None, :, None, None] * xn + b[None, :, None, None]

    y = jax.nn.relu(ln_cf(conv(x_nchw, params["w1"]), params["g1"], params["b1"]))
    y = jax.nn.relu(ln_cf(conv(y, params["w2"]), params["g2"], params["b2"]))
    return y


# --------------------------------------------------------------------------------------
if __name__ == "__main__":
    N, Cin, Cout, H, W = 2, 4, 8, 16, 16

    key = jax.random.PRNGKey(0)
    kx, kw1, kw2, kg1, kb1, kg2, kb2 = jax.random.split(key, 7)

    x = jax.random.normal(kx, (N, Cin, H, W), dtype=jnp.float32)

    params = {
        # conv weights in PyTorch layout (Cout, Cin, 3, 3), bias=False as in the module
        "w1": 0.1 * jax.random.normal(kw1, (Cout, Cin, 3, 3), dtype=jnp.float32),
        "w2": 0.1 * jax.random.normal(kw2, (Cout, Cout, 3, 3), dtype=jnp.float32),
        # LayerNorm affine params (perturbed so the affine path is exercised)
        "g1": 1.0 + 0.1 * jax.random.normal(kg1, (Cout,), dtype=jnp.float32),
        "b1": 0.1 * jax.random.normal(kb1, (Cout,), dtype=jnp.float32),
        "g2": 1.0 + 0.1 * jax.random.normal(kg2, (Cout,), dtype=jnp.float32),
        "b2": 0.1 * jax.random.normal(kb2, (Cout,), dtype=jnp.float32),
    }

    # 1) f32 compute path: tight check of the fused algorithm (taps, halo, LN, mask, store)
    out_f32 = jax.block_until_ready(vgg_block_forward(x, params, compute_dtype=jnp.float32))
    ref_f32 = jax.block_until_ready(ref_forward(x, params, compute_dtype=jnp.float32))
    assert out_f32.shape == (N, Cout, H, W), out_f32.shape
    err32 = float(jnp.max(jnp.abs(out_f32 - ref_f32)))
    assert jnp.allclose(out_f32, ref_f32, rtol=2e-4, atol=2e-4), f"f32 max abs err = {err32}"

    # 2) bf16-operand path (performance default) vs a matched-precision reference
    out_bf = jax.block_until_ready(vgg_block_forward(x, params, compute_dtype=jnp.bfloat16))
    ref_bf = jax.block_until_ready(ref_forward(x, params, compute_dtype=jnp.bfloat16))
    errbf = float(jnp.max(jnp.abs(out_bf - ref_bf)))
    assert jnp.allclose(out_bf, ref_bf, rtol=5e-2, atol=5e-2), f"bf16 max abs err = {errbf}"

    print("KERNEL_OK")
</pallas_src>

<mosaic_0001>
module attributes {stable_mosaic.version = 11 : i64} {
  func.func @_vgg_block_kernel(%arg0: i32, %arg1: memref<1x4x640xf32, #tpu.memory_space<vmem>>, %arg2: memref<8x36xf32, #tpu.memory_space<vmem>>, %arg3: memref<8x72xf32, #tpu.memory_space<vmem>>, %arg4: memref<8x4xf32, #tpu.memory_space<vmem>>, %arg5: memref<1x384xf32, #tpu.memory_space<vmem>>, %arg6: memref<1x8x384xf32, #tpu.memory_space<vmem>>, %arg7: memref<8x640xf32, #tpu.memory_space<vmem>>) attributes {dimension_semantics = [#tpu.dimension_semantics<parallel>], iteration_bounds = array<i64: 2>, scalar_prefetch = 0 : i64, scratch_operands = 1 : i64, tpu.core_type = #tpu.core_type<tc>, window_params = [{transform_indices = @transform_0, window_bounds = array<i64: 1, 4, 640>}, {pipeline_mode = #tpu.pipeline_mode<synchronous>, transform_indices = @transform_1, window_bounds = array<i64: 8, 36>}, {pipeline_mode = #tpu.pipeline_mode<synchronous>, transform_indices = @transform_2, window_bounds = array<i64: 8, 72>}, {pipeline_mode = #tpu.pipeline_mode<synchronous>, transform_indices = @transform_3, window_bounds = array<i64: 8, 4>}, {pipeline_mode = #tpu.pipeline_mode<synchronous>, transform_indices = @transform_4, window_bounds = array<i64: 1, 384>}, {transform_indices = @transform_5, window_bounds = array<i64: 1, 8, 384>}]} {
    %cst = arith.constant 0.000000e+00 : f32
    %0 = vector.broadcast %cst : f32 to vector<8x128xf32>
    %c0 = arith.constant 0 : index
    %c0_0 = arith.constant 0 : index
    %1 = vector.load %arg7[%c0, %c0_0] : memref<8x640xf32, #tpu.memory_space<vmem>>, vector<8x128xf32>
    tpu.vector_store %arg7[%c0, %c0_0], %0 {strides = array<i32>} : memref<8x640xf32, #tpu.memory_space<vmem>>, vector<8x128xf32>,
    %cst_1 = arith.constant 0.000000e+00 : f32
    %2 = vector.broadcast %cst_1 : f32 to vector<8x128xf32>
    %c0_2 = arith.constant 0 : index
    %c512 = arith.constant 512 : index
    %3 = vector.load %arg7[%c0_2, %c512] : memref<8x640xf32, #tpu.memory_space<vmem>>, vector<8x128xf32>
    tpu.vector_store %arg7[%c0_2, %c512], %2 {strides = array<i32>} : memref<8x640xf32, #tpu.memory_space<vmem>>, vector<8x128xf32>,
    %c0_3 = arith.constant 0 : index
    %c0_4 = arith.constant 0 : index
    %4 = vector.load %arg5[%c0_3, %c0_4] : memref<1x384xf32, #tpu.memory_space<vmem>>, vector<1x384xf32>
    %c0_5 = arith.constant 0 : index
    %c0_6 = arith.constant 0 : index
    %5 = vector.load %arg4[%c0_5, %c0_6] : memref<8x4xf32, #tpu.memory_space<vmem>>, vector<8x1xf32>
    %c0_7 = arith.constant 0 : index
    %c1 = arith.constant 1 : index
    %6 = vector.load %arg4[%c0_7, %c1] : memref<8x4xf32, #tpu.memory_space<vmem>>, vector<8x1xf32>
    %c0_8 = arith.constant 0 : index
    %c2 = arith.constant 2 : index
    %7 = vector.load %arg4[%c0_8, %c2] : memref<8x4xf32, #tpu.memory_space<vmem>>, vector<8x1xf32>
    %c0_9 = arith.constant 0 : index
    %c3 = arith.constant 3 : index
    %8 = vector.load %arg4[%c0_9, %c3] : memref<8x4xf32, #tpu.memory_space<vmem>>, vector<8x1xf32>
    %c0_10 = arith.constant 0 : index
    %c0_11 = arith.constant 0 : index
    %c109 = arith.constant 109 : index
    %9 = vector.load %arg1[%c0_10, %c0_11, %c109] : memref<1x4x640xf32, #tpu.memory_space<vmem>>, vector<1x4x384xf32>
    %10 = vector.shape_cast %9 : vector<1x4x384xf32> to vector<4x384xf32>
    %c0_12 = arith.constant 0 : index
    %c0_13 = arith.constant 0 : index
    %c110 = arith.constant 110 : index
    %11 = vector.load %arg1[%c0_12, %c0_13, %c110] : memref<1x4x640xf32, #tpu.memory_space<vmem>>, vector<1x4x384xf32>
    %12 = vector.shape_cast %11 : vector<1x4x384xf32> to vector<4x384xf32>
    %c0_14 = arith.constant 0 : index
    %c0_15 = arith.constant 0 : index
    %c111 = arith.constant 111 : index
    %13 = vector.load %arg1[%c0_14, %c0_15, %c111] : memref<1x4x640xf32, #tpu.memory_space<vmem>>, vector<1x4x384xf32>
    %14 = vector.shape_cast %13 : vector<1x4x384xf32> to vector<4x384xf32>
    %c0_16 = arith.constant 0 : index
    %c0_17 = arith.constant 0 : index
    %c127 = arith.constant 127 : index
    %15 = vector.load %arg1[%c0_16, %c0_17, %c127] : memref<1x4x640xf32, #tpu.memory_space<vmem>>, vector<1x4x384xf32>
    %16 = vector.shape_cast %15 : vector<1x4x384xf32> to vector<4x384xf32>
    %c0_18 = arith.constant 0 : index
    %c0_19 = arith.constant 0 : index
    %c128 = arith.constant 128 : index
    %17 = vector.load %arg1[%c0_18, %c0_19, %c128] : memref<1x4x640xf32, #tpu.memory_space<vmem>>, vector<1x4x384xf32>
    %18 = vector.shape_cast %17 : vector<1x4x384xf32> to vector<4x384xf32>
    %c0_20 = arith.constant 0 : index
    %c0_21 = arith.constant 0 : index
    %c129 = arith.constant 129 : index
    %19 = vector.load %arg1[%c0_20, %c0_21, %c129] : memref<1x4x640xf32, #tpu.memory_space<vmem>>, vector<1x4x384xf32>
    %20 = vector.shape_cast %19 : vector<1x4x384xf32> to vector<4x384xf32>
    %c0_22 = arith.constant 0 : index
    %c0_23 = arith.constant 0 : index
    %c145 = arith.constant 145 : index
    %21 = vector.load %arg1[%c0_22, %c0_23, %c145] : memref<1x4x640xf32, #tpu.memory_space<vmem>>, vector<1x4x384xf32>
    %22 = vector.shape_cast %21 : vector<1x4x384xf32> to vector<4x384xf32>
    %c0_24 = arith.constant 0 : index
    %c0_25 = arith.constant 0 : index
    %c146 = arith.constant 146 : index
    %23 = vector.load %arg1[%c0_24, %c0_25, %c146] : memref<1x4x640xf32, #tpu.memory_space<vmem>>, vector<1x4x384xf32>
    %24 = vector.shape_cast %23 : vector<1x4x384xf32> to vector<4x384xf32>
    %c0_26 = arith.constant 0 : index
    %c0_27 = arith.constant 0 : index
    %c147 = arith.constant 147 : index
    %25 = vector.load %arg1[%c0_26, %c0_27, %c147] : memref<1x4x640xf32, #tpu.memory_space<vmem>>, vector<1x4x384xf32>
    %26 = vector.shape_cast %25 : vector<1x4x384xf32> to vector<4x384xf32>
    %27 = tpu.concatenate %10, %12, %14, %16, %18, %20, %22, %24, %26 in 0 : vector<4x384xf32>, vector<4x384xf32>, vector<4x384xf32>, vector<4x384xf32>, vector<4x384xf32>, vector<4x384xf32>, vector<4x384xf32>, vector<4x384xf32>, vector<4x384xf32> -> vector<36x384xf32>
    %c0_28 = arith.constant 0 : index
    %c0_29 = arith.constant 0 : index
    %28 = vector.load %arg2[%c0_28, %c0_29] : memref<8x36xf32, #tpu.memory_space<vmem>>, vector<8x36xf32>
    %cst_30 = arith.constant dense<0.000000e+00> : vector<8x384xf32>
    %29 = tpu.matmul %28, %27, %cst_30 {dimension_numbers = #tpu.dot_dimension_numbers<[1], [0], [0], [1], [0, 0, 1, 1], [], []>} : vector<8x36xf32>, vector<36x384xf32>, vector<8x384xf32> -> vector<8x384xf32>
    %cst_31 = arith.constant dense<0.000000e+00> : vector<384xf32>
    %30 = vector.multi_reduction <add>, %29, %cst_31 [0] : vector<8x384xf32> to vector<384xf32>
    %31 = vector.shape_cast %30 : vector<384xf32> to vector<1x384xf32>
    %cst_32 = arith.constant 8.000000e+00 : f32
    %32 = vector.broadcast %cst_32 : f32 to vector<1x384xf32>
    %33 = arith.divf %31, %32 : vector<1x384xf32>
    %34 = vector.broadcast %33 : vector<1x384xf32> to vector<8x384xf32>
    %35 = arith.subf %29, %34 : vector<8x384xf32>
    %36 = arith.mulf %35, %35 : vector<8x384xf32>
    %cst_33 = arith.constant dense<0.000000e+00> : vector<384xf32>
    %37 = vector.multi_reduction <add>, %36, %cst_33 [0] : vector<8x384xf32> to vector<384xf32>
    %38 = vector.shape_cast %37 : vector<384xf32> to vector<1x384xf32>
    %cst_34 = arith.constant 8.000000e+00 : f32
    %39 = vector.broadcast %cst_34 : f32 to vector<1x384xf32>
    %40 = arith.divf %38, %39 : vector<1x384xf32>
    %cst_35 = arith.constant 9.99999997E-7 : f32
    %41 = vector.broadcast %cst_35 : f32 to vector<1x384xf32>
    %42 = arith.addf %40, %41 : vector<1x384xf32>
    %43 = math.rsqrt %42 : vector<1x384xf32>
    %44 = vector.broadcast %43 : vector<1x384xf32> to vector<8x384xf32>
    %45 = arith.mulf %35, %44 : vector<8x384xf32>
    %46 = vector.broadcast %5 : vector<8x1xf32> to vector<8x384xf32>
    %47 = arith.mulf %45, %46 : vector<8x384xf32>
    %48 = vector.broadcast %6 : vector<8x1xf32> to vector<8x384xf32>
    %49 = arith.addf %47, %48 : vector<8x384xf32>
    %cst_36 = arith.constant 0.000000e+00 : f32
    %50 = vector.broadcast %cst_36 : f32 to vector<8x384xf32>
    %51 = arith.maximumf %49, %50 : vector<8x384xf32>
    %52 = vector.broadcast %4 : vector<1x384xf32> to vector<8x384xf32>
    %53 = arith.mulf %51, %52 : vector<8x384xf32>
    %c0_37 = arith.constant 0 : index
    %c128_38 = arith.constant 128 : index
    %54 = vector.load %arg7[%c0_37, %c128_38] : memref<8x640xf32, #tpu.memory_space<vmem>>, vector<8x384xf32>
    tpu.vector_store %arg7[%c0_37, %c128_38], %53 {strides = array<i32>} : memref<8x640xf32, #tpu.memory_space<vmem>>, vector<8x384xf32>,
    %c0_39 = arith.constant 0 : index
    %c109_40 = arith.constant 109 : index
    %55 = vector.load %arg7[%c0_39, %c109_40] : memref<8x640xf32, #tpu.memory_space<vmem>>, vector<8x384xf32>
    %c0_41 = arith.constant 0 : index
    %c110_42 = arith.constant 110 : index
    %56 = vector.load %arg7[%c0_41, %c110_42] : memref<8x640xf32, #tpu.memory_space<vmem>>, vector<8x384xf32>
    %c0_43 = arith.constant 0 : index
    %c111_44 = arith.constant 111 : index
    %57 = vector.load %arg7[%c0_43, %c111_44] : memref<8x640xf32, #tpu.memory_space<vmem>>, vector<8x384xf32>
    %c0_45 = arith.constant 0 : index
    %c127_46 = arith.constant 127 : index
    %58 = vector.load %arg7[%c0_45, %c127_46] : memref<8x640xf32, #tpu.memory_space<vmem>>, vector<8x384xf32>
    %c0_47 = arith.constant 0 : index
    %c128_48 = arith.constant 128 : index
    %59 = vector.load %arg7[%c0_47, %c128_48] : memref<8x640xf32, #tpu.memory_space<vmem>>, vector<8x384xf32>
    %c0_49 = arith.constant 0 : index
    %c129_50 = arith.constant 129 : index
    %60 = vector.load %arg7[%c0_49, %c129_50] : memref<8x640xf32, #tpu.memory_space<vmem>>, vector<8x384xf32>
    %c0_51 = arith.constant 0 : index
    %c145_52 = arith.constant 145 : index
    %61 = vector.load %arg7[%c0_51, %c145_52] : memref<8x640xf32, #tpu.memory_space<vmem>>, vector<8x384xf32>
    %c0_53 = arith.constant 0 : index
    %c146_54 = arith.constant 146 : index
    %62 = vector.load %arg7[%c0_53, %c146_54] : memref<8x640xf32, #tpu.memory_space<vmem>>, vector<8x384xf32>
    %c0_55 = arith.constant 0 : index
    %c147_56 = arith.constant 147 : index
    %63 = vector.load %arg7[%c0_55, %c147_56] : memref<8x640xf32, #tpu.memory_space<vmem>>, vector<8x384xf32>
    %64 = tpu.concatenate %55, %56, %57, %58, %59, %60, %61, %62, %63 in 0 : vector<8x384xf32>, vector<8x384xf32>, vector<8x384xf32>, vector<8x384xf32>, vector<8x384xf32>, vector<8x384xf32>, vector<8x384xf32>, vector<8x384xf32>, vector<8x384xf32> -> vector<72x384xf32>
    %c0_57 = arith.constant 0 : index
    %c0_58 = arith.constant 0 : index
    %65 = vector.load %arg3[%c0_57, %c0_58] : memref<8x72xf32, #tpu.memory_space<vmem>>, vector<8x72xf32>
    %cst_59 = arith.constant dense<0.000000e+00> : vector<8x384xf32>
    %66 = tpu.matmul %65, %64, %cst_59 {dimension_numbers = #tpu.dot_dimension_numbers<[1], [0], [0], [1], [0, 0, 1, 1], [], []>} : vector<8x72xf32>, vector<72x384xf32>, vector<8x384xf32> -> vector<8x384xf32>
    %cst_60 = arith.constant dense<0.000000e+00> : vector<384xf32>
    %67 = vector.multi_reduction <add>, %66, %cst_60 [0] : vector<8x384xf32> to vector<384xf32>
    %68 = vector.shape_cast %67 : vector<384xf32> to vector<1x384xf32>
    %cst_61 = arith.constant 8.000000e+00 : f32
    %69 = vector.broadcast %cst_61 : f32 to vector<1x384xf32>
    %70 = arith.divf %68, %69 : vector<1x384xf32>
    %71 = vector.broadcast %70 : vector<1x384xf32> to vector<8x384xf32>
    %72 = arith.subf %66, %71 : vector<8x384xf32>
    %73 = arith.mulf %72, %72 : vector<8x384xf32>
    %cst_62 = arith.constant dense<0.000000e+00> : vector<384xf32>
    %74 = vector.multi_reduction <add>, %73, %cst_62 [0] : vector<8x384xf32> to vector<384xf32>
    %75 = vector.shape_cast %74 : vector<384xf32> to vector<1x384xf32>
    %cst_63 = arith.constant 8.000000e+00 : f32
    %76 = vector.broadcast %cst_63 : f32 to vector<1x384xf32>
    %77 = arith.divf %75, %76 : vector<1x384xf32>
    %cst_64 = arith.constant 9.99999997E-7 : f32
    %78 = vector.broadcast %cst_64 : f32 to vector<1x384xf32>
    %79 = arith.addf %77, %78 : vector<1x384xf32>
    %80 = math.rsqrt %79 : vector<1x384xf32>
    %81 = vector.broadcast %80 : vector<1x384xf32> to vector<8x384xf32>
    %82 = arith.mulf %72, %81 : vector<8x384xf32>
    %83 = vector.broadcast %7 : vector<8x1xf32> to vector<8x384xf32>
    %84 = arith.mulf %82, %83 : vector<8x384xf32>
    %85 = vector.broadcast %8 : vector<8x1xf32> to vector<8x384xf32>
    %86 = arith.addf %84, %85 : vector<8x384xf32>
    %cst_65 = arith.constant 0.000000e+00 : f32
    %87 = vector.broadcast %cst_65 : f32 to vector<8x384xf32>
    %88 = arith.maximumf %86, %87 : vector<8x384xf32>
    %89 = vector.broadcast %4 : vector<1x384xf32> to vector<8x384xf32>
    %90 = arith.mulf %88, %89 : vector<8x384xf32>
    %c0_66 = arith.constant 0 : index
    %c0_67 = arith.constant 0 : index
    %c0_68 = arith.constant 0 : index
    %91 = vector.load %arg6[%c0_66, %c0_67, %c0_68] : memref<1x8x384xf32, #tpu.memory_space<vmem>>, vector<1x8x384xf32>
    %92 = vector.shape_cast %91 : vector<1x8x384xf32> to vector<8x384xf32>
    %93 = vector.shape_cast %90 : vector<8x384xf32> to vector<1x8x384xf32>
    tpu.vector_store %arg6[%c0_66, %c0_67, %c0_68], %93 {strides = array<i32>} : memref<1x8x384xf32, #tpu.memory_space<vmem>>, vector<1x8x384xf32>,
    return
  }
  func.func @transform_0(%arg0: i32) -> (i32, i32, i32) {
    %c0_i32 = arith.constant 0 : i32
    %c0_i32_0 = arith.constant 0 : i32
    %c0_i32_1 = arith.constant 0 : i32
    return %arg0, %c0_i32, %c0_i32_0 : i32, i32, i32
  }
  func.func @transform_1(%arg0: i32) -> (i32, i32) {
    %c0_i32 = arith.constant 0 : i32
    %c0_i32_0 = arith.constant 0 : i32
    %c0_i32_1 = arith.constant 0 : i32
    return %c0_i32, %c0_i32_0 : i32, i32
  }
  func.func @transform_2(%arg0: i32) -> (i32, i32) {
    %c0_i32 = arith.constant 0 : i32
    %c0_i32_0 = arith.constant 0 : i32
    %c0_i32_1 = arith.constant 0 : i32
    return %c0_i32, %c0_i32_0 : i32, i32
  }
  func.func @transform_3(%arg0: i32) -> (i32, i32) {
    %c0_i32 = arith.constant 0 : i32
    %c0_i32_0 = arith.constant 0 : i32
    %c0_i32_1 = arith.constant 0 : i32
    return %c0_i32, %c0_i32_0 : i32, i32
  }
  func.func @transform_4(%arg0: i32) -> (i32, i32) {
    %c0_i32 = arith.constant 0 : i32
    %c0_i32_0 = arith.constant 0 : i32
    %c0_i32_1 = arith.constant 0 : i32
    return %c0_i32, %c0_i32_0 : i32, i32
  }
  func.func @transform_5(%arg0: i32) -> (i32, i32, i32) {
    %c0_i32 = arith.constant 0 : i32
    %c0_i32_0 = arith.constant 0 : i32
    %c0_i32_1 = arith.constant 0 : i32
    return %arg0, %c0_i32, %c0_i32_0 : i32, i32, i32
  }
}

</mosaic_0001>

<llo_original>
// kernel: tpu_custom_call.1
$region0: #{tpu_custom_call.1}
  #allocation0 [shape = 'u32[]', space=smem, size = 0x4, offset = 0x4, fixed_abs, tag = 'smem constant byte address 0x4 - core index']
  #allocation1 [shape = 'u32[144,128]{1,0:T(1,128)}', space=vmem, size = 0x12000, scoped, tag = 'internal scratch']
  #allocation2 [shape = 'f32[8,640]{1,0:T(8,128)}', space=vmem, size = 0x5000, scoped, tag = 'scratch operand']
  %s0 = inlined_call_operand.hbm [shape: f32[2,4,640], index: 0, kind: input, shape index: {}]
  %s1 = inlined_call_operand.vmem [shape: f32[8,36], index: 1, kind: input, shape index: {}]
  %s2 = inlined_call_operand.hbm [shape: f32[8,72], index: 2, kind: input, shape index: {}]
  %s3 = inlined_call_operand.vmem [shape: f32[8,4], index: 3, kind: input, shape index: {}]
  %s4 = inlined_call_operand.vmem [shape: f32[1,384], index: 4, kind: input, shape index: {}]
  %s5 = inlined_call_operand.hbm [shape: f32[2,8,384], index: 5, kind: output, shape index: {}]
  %s6 = sld [smem:[#allocation0]]
  $region61: #{tpu_custom_call.1} parent=0
    _
  %s8 = ssub.s32 1, %s6
  %s9 = scalar_select 0, %s8, %s6
  $region1: #{tpu_custom_call.1} parent=0
    #allocation3 [shape = 'u8[20480]{0}', space=vmem, size = 0x5000, scoped, tag = 'input window, operand 0']
    #allocation4 [shape = 's32[2]{0}', space=sflag, size = 0x8, scoped, tag = 'scoped memory for tpu_custom_call.1']
    #allocation5 [shape = 's32[2]{0}', space=sflag, size = 0x8, scoped, tag = 'scoped memory for tpu_custom_call.1']
    #allocation6 [shape = 'u8[4096]{0}', space=vmem, size = 0x1000, scoped, tag = 'input window, operand 2, single buffered']
    #allocation7 [shape = 's32[1]{0}', space=sflag, size = 0x4, scoped, tag = 'scoped memory for tpu_custom_call.1']
    #allocation8 [shape = 'u8[24576]{0}', space=vmem, size = 0x6000, scoped, tag = 'output window, operand 0']
    %10 = vsyncpa [#allocation4], 0
    %s11 = scalar_lea.sflag [#allocation4], 1
    %12 = vsyncpa %s11, 0
    %13 = vsyncpa [#allocation7], 0
    %14 = vsyncpa [#allocation5], 0
    %s15 = scalar_lea.sflag [#allocation5], 1
    %16 = vsyncpa %s15, 0
    loop: start=0, step=1, limit=4
    $region2: #{tpu_custom_call.1} parent=1 // loop_pre_header
      _
    $region3: #{tpu_custom_call.1} parent=1 // loop_header
      %s18 = sphi 0, %s22
      %p19 = scmp.ge.s32.totalorder %s18, 4
      %s28 = sphi 0, %s30
      %s31 = sphi 0, %s28
      %s32 = sphi 0, %s31
      %s48 = sphi 0, %s32
      %s52 = sphi 0, %s52
      %s54 = sphi 0, %s52
      %s55 = sphi 0, %s54
      %s69 = sphi 0, %s55
      %s73 = sphi 0, %s73
      %s75 = sphi 0, %s73
      %s76 = sphi 0, %s75
      %s90 = sphi 0, %s76
      %s94 = sphi 0, %s94
      %s96 = sphi 0, %s94
      %s97 = sphi 0, %s96
      %s111 = sphi 0, %s97
      %s115 = sphi 0, %s115
      %s117 = sphi 0, %s115
      %s118 = sphi 0, %s117
      %s132 = sphi 0, %s118
      %s138 = sphi 0, %s140
      %s141 = sphi 0, %s138
      %s142 = sphi 0, %s141
      %s158 = sphi 0, %s142
    $region4: #{tpu_custom_call.1} parent=1 // loop_header_branch
      %21 = sbr.rel (%p19) target = $region8
    $region5: #{tpu_custom_call.1} parent=1 // loop_body
      %s23 = ssub.s32 %s18, 1
      %s24 = ssub.s32 %s18, 2
      %s25 = sadd.s32 %s18, 1
      %s26 = ssub.s32 %s18, %s25
      %p27 = scmp.eq.s32.totalorder %s26, 0
      %s29 = sadd.s32 %s28, 1
      %s30 = scalar_select %p27, %s28, %s29
      %p33 = pneg %p27
      %p34 = scmp.eq.s32.totalorder %s18, 1
      %p35 = por %p33, %p34
      %p36 = scmp.ne.s32.totalorder %s28, %s31
      %p37 = scmp.eq.s32.totalorder %s18, 0
      %p38 = por %p36, %p37
      %p39 = scmp.ne.s32.totalorder %s28, %s31
      %p40 = scmp.eq.s32.totalorder %s23, 1
      %p41 = por %p39, %p40
      %p42 = scmp.ne.s32.totalorder %s31, %s32
      %p43 = scmp.eq.s32.totalorder %s23, 0
      %p44 = por %p42, %p43
      %p45 = scmp.ne.s32.totalorder %s31, %s32
      %p46 = scmp.eq.s32.totalorder %s24, 1
      %p47 = por %p45, %p46
      %p49 = scmp.ne.s32.totalorder %s32, %s48
      %p50 = scmp.eq.s32.totalorder %s24, 0
      %p51 = por %p49, %p50
      %s53 = sadd.s32 %s52, 1
      %p56 = scmp.eq.s32.totalorder %s18, 1
      %p57 = scmp.ne.s32.totalorder %s52, %s54
      %p58 = scmp.eq.s32.totalorder %s18, 0
      %p59 = por %p57, %p58
      %p60 = scmp.ne.s32.totalorder %s52, %s54
      %p61 = scmp.eq.s32.totalorder %s23, 1
      %p62 = por %p60, %p61
      %p63 = scmp.ne.s32.totalorder %s54, %s55
      %p64 = scmp.eq.s32.totalorder %s23, 0
      %p65 = por %p63, %p64
      %p66 = scmp.ne.s32.totalorder %s54, %s55
      %p67 = scmp.eq.s32.totalorder %s24, 1
      %p68 = por %p66, %p67
      %p70 = scmp.ne.s32.totalorder %s55, %s69
      %p71 = scmp.eq.s32.totalorder %s24, 0
      %p72 = por %p70, %p71
      %s74 = sadd.s32 %s73, 1
      %p77 = scmp.eq.s32.totalorder %s18, 1
      %p78 = scmp.ne.s32.totalorder %s73, %s75
      %p79 = scmp.eq.s32.totalorder %s18, 0
      %p80 = por %p78, %p79
      %p81 = scmp.ne.s32.totalorder %s73, %s75
      %p82 = scmp.eq.s32.totalorder %s23, 1
      %p83 = por %p81, %p82
      %p84 = scmp.ne.s32.totalorder %s75, %s76
      %p85 = scmp.eq.s32.totalorder %s23, 0
      %p86 = por %p84, %p85
      %p87 = scmp.ne.s32.totalorder %s75, %s76
      %p88 = scmp.eq.s32.totalorder %s24, 1
      %p89 = por %p87, %p88
      %p91 = scmp.ne.s32.totalorder %s76, %s90
      %p92 = scmp.eq.s32.totalorder %s24, 0
      %p93 = por %p91, %p92
      %s95 = sadd.s32 %s94, 1
      %p98 = scmp.eq.s32.totalorder %s18, 1
      %p99 = scmp.ne.s32.totalorder %s94, %s96
      %p100 = scmp.eq.s32.totalorder %s18, 0
      %p101 = por %p99, %p100
      %p102 = scmp.ne.s32.totalorder %s94, %s96
      %p103 = scmp.eq.s32.totalorder %s23, 1
      %p104 = por %p102, %p103
      %p105 = scmp.ne.s32.totalorder %s96, %s97
      %p106 = scmp.eq.s32.totalorder %s23, 0
      %p107 = por %p105, %p106
      %p108 = scmp.ne.s32.totalorder %s96, %s97
      %p109 = scmp.eq.s32.totalorder %s24, 1
      %p110 = por %p108, %p109
      %p112 = scmp.ne.s32.totalorder %s97, %s111
      %p113 = scmp.eq.s32.totalorder %s24, 0
      %p114 = por %p112, %p113
      %s116 = sadd.s32 %s115, 1
      %p119 = scmp.eq.s32.totalorder %s18, 1
      %p120 = scmp.ne.s32.totalorder %s115, %s117
      %p121 = scmp.eq.s32.totalorder %s18, 0
      %p122 = por %p120, %p121
      %p123 = scmp.ne.s32.totalorder %s115, %s117
      %p124 = scmp.eq.s32.totalorder %s23, 1
      %p125 = por %p123, %p124
      %p126 = scmp.ne.s32.totalorder %s117, %s118
      %p127 = scmp.eq.s32.totalorder %s23, 0
      %p128 = por %p126, %p127
      %p129 = scmp.ne.s32.totalorder %s117, %s118
      %p130 = scmp.eq.s32.totalorder %s24, 1
      %p131 = por %p129, %p130
      %p133 = scmp.ne.s32.totalorder %s118, %s132
      %p134 = scmp.eq.s32.totalorder %s24, 0
      %p135 = por %p133, %p134
      %s136 = ssub.s32 %s18, %s25
      %p137 = scmp.eq.s32.totalorder %s136, 0
      %s139 = sadd.s32 %s138, 1
      %s140 = scalar_select %p137, %s138, %s139
      %p143 = pneg %p137
      %p144 = scmp.eq.s32.totalorder %s18, 1
      %p145 = por %p143, %p144
      %p146 = scmp.ne.s32.totalorder %s138, %s141
      %p147 = scmp.eq.s32.totalorder %s18, 0
      %p148 = por %p146, %p147
      %p149 = scmp.ne.s32.totalorder %s138, %s141
      %p150 = scmp.eq.s32.totalorder %s23, 1
      %p151 = por %p149, %p150
      %p152 = scmp.ne.s32.totalorder %s141, %s142
      %p153 = scmp.eq.s32.totalorder %s23, 0
      %p154 = por %p152, %p153
      %p155 = scmp.ne.s32.totalorder %s141, %s142
      %p156 = scmp.eq.s32.totalorder %s24, 1
      %p157 = por %p155, %p156
      %p159 = scmp.ne.s32.totalorder %s142, %s158
      %p160 = scmp.eq.s32.totalorder %s24, 0
      %p161 = por %p159, %p160
      %p162 = scmp.le.s32.totalorder 1, %s18
      %p163 = scmp.lt.s32.totalorder %s18, 3
      %p164 = pnand %p162, %p163
      %p165 = pneg %p164
      // Predicated region
      $region9: #{tpu_custom_call.1} parent=5 // pred_check
        _
      $region10: #{tpu_custom_call.1} parent=5 // pred_check_branch
        %167 = sbr.rel (%p164) target = $region12
      $region11: #{tpu_custom_call.1} parent=5 // pred_region
        %s168 = ssub.s32 %s18, 1
        // Predicated region
        $region13: #{tpu_custom_call.1} parent=11 // pred_check
          %p169 = pneg %p65
        $region14: #{tpu_custom_call.1} parent=11 // pred_check_branch
          %171 = sbr.rel (%p169) target = $region16
        $region15: #{tpu_custom_call.1} parent=11 // pred_region
          _
        $region16: #{tpu_custom_call.1} parent=11 // pred_fallthru
          _
        // Predicated region
        $region17: #{tpu_custom_call.1} parent=11 // pred_check
          %p172 = pneg %p86
        $region18: #{tpu_custom_call.1} parent=11 // pred_check_branch
          %174 = sbr.rel (%p172) target = $region20
        $region19: #{tpu_custom_call.1} parent=11 // pred_region
          %s176 = ssub.s32 128, 128
          %177 = vsyncadd [#allocation7], %s176
          %s179 = sshll.u32 [#allocation6], 4
          %s180 = int_to_ptr.vmem [resolvable:$true] %s179
          %182 = dma.hbm_to_vmem [thread:$0]  %s2, 128, %s180, [#allocation7]
        $region20: #{tpu_custom_call.1} parent=11 // pred_fallthru
          _
        // Predicated region
        $region21: #{tpu_custom_call.1} parent=11 // pred_check
          %p183 = pneg %p107
        $region22: #{tpu_custom_call.1} parent=11 // pred_check_branch
          %185 = sbr.rel (%p183) target = $region24
        $region23: #{tpu_custom_call.1} parent=11 // pred_region
          _
        $region24: #{tpu_custom_call.1} parent=11 // pred_fallthru
          _
        // Predicated region
        $region25: #{tpu_custom_call.1} parent=11 // pred_check
          %p186 = pneg %p128
        $region26: #{tpu_custom_call.1} parent=11 // pred_check_branch
          %188 = sbr.rel (%p186) target = $region28
        $region27: #{tpu_custom_call.1} parent=11 // pred_region
          _
        $region28: #{tpu_custom_call.1} parent=11 // pred_fallthru
          _
      $region12: #{tpu_custom_call.1} parent=5 // pred_fallthru
        _
      %p189 = scmp.lt.s32.totalorder %s18, 2
      // Predicated region
      $region29: #{tpu_custom_call.1} parent=5 // pred_check
        %p190 = pneg %p189
      $region30: #{tpu_custom_call.1} parent=5 // pred_check_branch
        %192 = sbr.rel (%p190) target = $region32
      $region31: #{tpu_custom_call.1} parent=5 // pred_region
        // Predicated region
        $region33: #{tpu_custom_call.1} parent=31 // pred_check
          %p193 = pneg %p38
        $region34: #{tpu_custom_call.1} parent=31 // pred_check_branch
          %195 = sbr.rel (%p193) target = $region36
        $region35: #{tpu_custom_call.1} parent=31 // pred_region
          %s196 = sand.u32 %s28, 1
          %s197 = scalar_lea.sflag [#allocation4], %s196
          %s198 = sand.u32 %s28, 1
          %s199 = smul.addr %s198, 20
          %s200 = scalar_lea.vmem [#allocation3], %s199
          %s202 = ssub.s32 320, 320
          %203 = vsyncadd %s197, %s202
          %s204 = smul.addr %s18, 5
          %s205 = smul.addr %s204, 64
          %s206 = scalar_lea.hbm %s0, %s205
          %s208 = sshll.u32 %s200, 4
          %s209 = int_to_ptr.vmem [resolvable:$true] %s208
          %211 = dma.hbm_to_vmem [thread:$0]  %s206, 320, %s209, %s197
        $region36: #{tpu_custom_call.1} parent=31 // pred_fallthru
          _
      $region32: #{tpu_custom_call.1} parent=5 // pred_fallthru
        _
      %p212 = scmp.le.s32.totalorder 1, %s18
      %p213 = scmp.lt.s32.totalorder %s18, 3
      %p214 = pnand %p212, %p213
      %p215 = pneg %p214
      // Predicated region
      $region37: #{tpu_custom_call.1} parent=5 // pred_check
        _
      $region38: #{tpu_custom_call.1} parent=5 // pred_check_branch
        %217 = sbr.rel (%p214) target = $region40
      $region39: #{tpu_custom_call.1} parent=5 // pred_region
        %s218 = ssub.s32 %s18, 1
        %s219 = sand.u32 %s31, 1
        %s220 = scalar_lea.sflag [#allocation4], %s219
        %s221 = sand.u32 %s31, 1
        %s222 = smul.addr %s221, 20
        %s223 = scalar_lea.vmem [#allocation3], %s222
        // Predicated region
        $region41: #{tpu_custom_call.1} parent=39 // pred_check
          %p224 = pneg %p44
        $region42: #{tpu_custom_call.1} parent=39 // pred_check_branch
          %226 = sbr.rel (%p224) target = $region44
        $region43: #{tpu_custom_call.1} parent=39 // pred_region
          %227 = dma.done %s220, 320
        $region44: #{tpu_custom_call.1} parent=39 // pred_fallthru
          _
        // Predicated region
        $region45: #{tpu_custom_call.1} parent=39 // pred_check
          %p228 = pneg %p86
        $region46: #{tpu_custom_call.1} parent=39 // pred_check_branch
          %230 = sbr.rel (%p228) target = $region48
        $region47: #{tpu_custom_call.1} parent=39 // pred_region
          %231 = dma.done [#allocation7], 128
        $region48: #{tpu_custom_call.1} parent=39 // pred_fallthru
          _
        %s232 = sand.u32 %s31, 1
        %s233 = scalar_lea.sflag [#allocation4], %s232
        %s234 = sand.u32 %s31, 1
        %s235 = smul.addr %s234, 20
        %s236 = scalar_lea.vmem [#allocation3], %s235
        %p237 = pneg %p44
        %p238 = pneg %p41
        %p239 = pneg %p65
        %p240 = pneg %p62
        %p241 = pneg %p86
        %p242 = pneg %p83
        %p243 = pneg %p107
        %p244 = pneg %p104
        %p245 = pneg %p128
        %p246 = pneg %p125
        %p247 = pneg %p154
        %p248 = pneg %p151
        %s249 = sand.u32 %s141, 1
        %s250 = scalar_lea.sflag [#allocation5], %s249
        %s251 = sand.u32 %s141, 1
        %s252 = smul.addr %s251, 24
        %s253 = scalar_lea.vmem [#allocation8], %s252
        %254 = vst [vmem:[#allocation2] sm:$0xff] 0.0
        %255 = vst [vmem:[#allocation2 + $0x20] sm:$0xff] 0.0
        %v256 = vld [vmem:[%s4] sm:$0x7]
        %v257 = vld [vmem:[%s3] sm:$0xff]
        %v258 = vld [vmem:[%s223] sm:$0xff]
        %v259 = vld [vmem:[%s223 + $0x8] sm:$0xff]
        %v260 = vld [vmem:[%s223 + $0x4] sm:$0xff]
        %v261 = vld [vmem:[%s223 + $0xc] sm:$0xf]
        %v262 = vld [vmem:[%s223 + $0x4] sm:$0xff]
        %v263 = vld [vmem:[%s223 + $0xc] sm:$0xff]
        %v266 = vcombine.high %v258, %v258
        %v267 = vcombine.high %v259, %v259
        %v270 = vcombine.low %v258, %v258
        %v271 = vcombine.low %v259, %v259
        %272 = vrot.lane.b32.xlu0 %v270, 127
        %v273 = vpop.permute.xlu0 %272
        %274 = vrot.lane.b32.xlu0 %v258, 127
        %v275 = vpop.permute.xlu0 %274
        %276 = vrot.lane.b32.xlu0 %v271, 127
        %v277 = vpop.permute.xlu0 %276
        %278 = vrot.lane.b32.xlu0 %v259, 127
        %v279 = vpop.permute.xlu0 %278
        %vm280 = vcmask 1039360
        %v281 = vsel %vm280, %v273, %v275
        %v282 = vsel %vm280, %v275, %v277
        %v283 = vsel %vm280, %v277, %v279
        %288 = vrot.lane.b32.xlu0 %v258, 126
        %v289 = vpop.permute.xlu0 %288
        %290 = vrot.lane.b32.xlu0 %v266, 126
        %v291 = vpop.permute.xlu0 %290
        %292 = vrot.lane.b32.xlu0 %v259, 126
        %v293 = vpop.permute.xlu0 %292
        %294 = vrot.lane.b32.xlu0 %v267, 126
        %v295 = vpop.permute.xlu0 %294
        %vm296 = vcmask 1031168
        %v297 = vsel %vm296, %v289, %v291
        %v298 = vsel %vm296, %v291, %v293
        %v299 = vsel %vm296, %v293, %v295
        %304 = vrot.lane.b32.xlu0 %v270, 110
        %v305 = vpop.permute.xlu0 %304
        %306 = vrot.lane.b32.xlu0 %v258, 110
        %v307 = vpop.permute.xlu0 %306
        %308 = vrot.lane.b32.xlu0 %v271, 110
        %v309 = vpop.permute.xlu0 %308
        %310 = vrot.lane.b32.xlu0 %v259, 110
        %v311 = vpop.permute.xlu0 %310
        %vm312 = vcmask 900096
        %v313 = vsel %vm312, %v305, %v307
        %v314 = vsel %vm312, %v307, %v309
        %v315 = vsel %vm312, %v309, %v311
        %v322 = vcombine.high %v260, %v260
        %323 = vrot.lane.b32.xlu0 %v260, 109
        %v324 = vpop.permute.xlu0 %323
        %325 = vrot.lane.b32.xlu0 %v322, 109
        %v326 = vpop.permute.xlu0 %325
        %327 = vrot.lane.b32.xlu0 %v261, 109
        %v328 = vpop.permute.xlu0 %327
        %vm329 = vcmask 891904
        %v330 = vsel %vm329, %v324, %v326
        %v331 = vsel %vm329, %v326, %v328
        %v338 = vcombine.low %v262, %v262
        %v339 = vcombine.low %v263, %v263
        %340 = vrot.lane.b32.xlu0 %v338, 108
        %v341 = vpop.permute.xlu0 %340
        %342 = vrot.lane.b32.xlu0 %v262, 108
        %v343 = vpop.permute.xlu0 %342
        %344 = vrot.lane.b32.xlu0 %v339, 108
        %v345 = vpop.permute.xlu0 %344
        %346 = vrot.lane.b32.xlu0 %v263, 108
        %v347 = vpop.permute.xlu0 %346
        %vm348 = vcmask 883712
        %v349 = vsel %vm348, %v341, %v343
        %v350 = vsel %vm348, %v343, %v345
        %v351 = vsel %vm348, %v345, %v347
        %v356 = vcombine.high %v262, %v262
        %v357 = vcombine.high %v263, %v263
        %358 = vrot.lane.b32.xlu0 %v262, 92
        %v359 = vpop.permute.xlu0 %358
        %360 = vrot.lane.b32.xlu0 %v356, 92
        %v361 = vpop.permute.xlu0 %360
        %362 = vrot.lane.b32.xlu0 %v263, 92
        %v363 = vpop.permute.xlu0 %362
        %364 = vrot.lane.b32.xlu0 %v357, 92
        %v365 = vpop.permute.xlu0 %364
        %vm366 = vcmask 752640
        %v367 = vsel %vm366, %v359, %v361
        %v368 = vsel %vm366, %v361, %v363
        %v369 = vsel %vm366, %v363, %v365
        %374 = vrot.lane.b32.xlu0 %v338, 91
        %v375 = vpop.permute.xlu0 %374
        %376 = vrot.lane.b32.xlu0 %v262, 91
        %v377 = vpop.permute.xlu0 %376
        %378 = vrot.lane.b32.xlu0 %v339, 91
        %v379 = vpop.permute.xlu0 %378
        %380 = vrot.lane.b32.xlu0 %v263, 91
        %v381 = vpop.permute.xlu0 %380
        %vm382 = vcmask 744448
        %v383 = vsel %vm382, %v375, %v377
        %v384 = vsel %vm382, %v377, %v379
        %v385 = vsel %vm382, %v379, %v381
        %390 = vrot.lane.b32.xlu0 %v262, 90
        %v391 = vpop.permute.xlu0 %390
        %392 = vrot.lane.b32.xlu0 %v356, 90
        %v393 = vpop.permute.xlu0 %392
        %394 = vrot.lane.b32.xlu0 %v263, 90
        %v395 = vpop.permute.xlu0 %394
        %396 = vrot.lane.b32.xlu0 %v357, 90
        %v397 = vpop.permute.xlu0 %396
        %vm398 = vcmask 736256
        %v399 = vsel %vm398, %v391, %v393
        %v400 = vsel %vm398, %v393, %v395
        %v401 = vsel %vm398, %v395, %v397
        %vm402 = vcmask 1043456
        %v403 = vsel %vm402, %v258, %v281
        %v404 = vsel %vm402, %v266, %v282
        %v405 = vsel %vm402, %v259, %v283
        %v406 = vsel %vm402, %v267, %v279
        %v407 = vsel %vm402, %v297, %v313
        %v408 = vsel %vm402, %v298, %v314
        %v409 = vsel %vm402, %v299, %v315
        %v410 = vsel %vm402, %v295, %v311
        %v411 = vsel %vm402, %v324, %v341
        %v412 = vsel %vm402, %v330, %v349
        %v413 = vsel %vm402, %v331, %v350
        %v414 = vsel %vm402, %v328, %v351
        %v415 = vsel %vm402, %v359, %v375
        %v416 = vsel %vm402, %v367, %v383
        %v417 = vsel %vm402, %v368, %v384
        %v418 = vsel %vm402, %v369, %v385
        %v419 = vld [vmem:[%s1] sm:$0xff]
        %436 = vrot.lane.b32.xlu0 %v403, 19
        %v437 = vpop.permute.xlu0 %436
        %438 = vrot.lane.b32.xlu0 %v404, 19
        %v439 = vpop.permute.xlu0 %438
        %440 = vrot.lane.b32.xlu0 %v405, 19
        %v441 = vpop.permute.xlu0 %440
        %442 = vrot.lane.b32.xlu0 %v406, 19
        %v443 = vpop.permute.xlu0 %442
        %444 = vrot.lane.b32.xlu0 %v407, 19
        %v445 = vpop.permute.xlu0 %444
        %446 = vrot.lane.b32.xlu0 %v408, 19
        %v447 = vpop.permute.xlu0 %446
        %448 = vrot.lane.b32.xlu0 %v409, 19
        %v449 = vpop.permute.xlu0 %448
        %450 = vrot.lane.b32.xlu0 %v410, 19
        %v451 = vpop.permute.xlu0 %450
        %452 = vrot.lane.b32.xlu0 %v411, 19
        %v453 = vpop.permute.xlu0 %452
        %454 = vrot.lane.b32.xlu0 %v412, 19
        %v455 = vpop.permute.xlu0 %454
        %456 = vrot.lane.b32.xlu0 %v413, 19
        %v457 = vpop.permute.xlu0 %456
        %458 = vrot.lane.b32.xlu0 %v414, 19
        %v459 = vpop.permute.xlu0 %458
        %460 = vrot.lane.b32.xlu0 %v415, 19
        %v461 = vpop.permute.xlu0 %460
        %462 = vrot.lane.b32.xlu0 %v416, 19
        %v463 = vpop.permute.xlu0 %462
        %464 = vrot.lane.b32.xlu0 %v417, 19
        %v465 = vpop.permute.xlu0 %464
        %466 = vrot.lane.b32.xlu0 %v418, 19
        %v467 = vpop.permute.xlu0 %466
        %468 = vrot.lane.b32.xlu0 %v391, 19
        %v469 = vpop.permute.xlu0 %468
        %470 = vrot.lane.b32.xlu0 %v399, 19
        %v471 = vpop.permute.xlu0 %470
        %472 = vrot.lane.b32.xlu0 %v400, 19
        %v473 = vpop.permute.xlu0 %472
        %474 = vrot.lane.b32.xlu0 %v401, 19
        %v475 = vpop.permute.xlu0 %474
        %vm476 = vcmask 154624
        %v477 = vsel %vm476, %v437, %v439
        %v478 = vsel %vm476, %v439, %v441
        %v479 = vsel %vm476, %v441, %v443
        %v480 = vsel %vm476, %v445, %v447
        %v481 = vsel %vm476, %v447, %v449
        %v482 = vsel %vm476, %v449, %v451
        %v483 = vsel %vm476, %v453, %v455
        %v484 = vsel %vm476, %v455, %v457
        %v485 = vsel %vm476, %v457, %v459
        %v486 = vsel %vm476, %v461, %v463
        %v487 = vsel %vm476, %v463, %v465
        %v488 = vsel %vm476, %v465, %v467
        %v489 = vsel %vm476, %v469, %v471
        %v490 = vsel %vm476, %v471, %v473
        %v491 = vsel %vm476, %v473, %v475
        %vm504 = vcmask 293888
        %v506 = vsel %vm504, %v419, 0
        %v508 = vsel %vm402, %v489, 0
        %v510 = vsel %vm402, %v490, 0
        %v512 = vsel %vm402, %v491, 0
        %514 = vmatprep.subr.mxu0 0.0
        %515 = vmatpush1.msra.mxu0 0.0
        %516 = vmatprep.subr.mxu0 0.0
        %517 = vmatpush1.msra.mxu0 0.0
        %518 = vmatprep.subr.mxu0 0.0
        %519 = vmatpush1.msra.mxu0 0.0
        %520 = vmatprep.subr.mxu0 0.0
        %521 = vmatpush1.msra.mxu0 0.0
        %522 = vmatprep.subr.mxu0 0.0
        %523 = vmatpush1.msra.mxu0 0.0
        %524 = vmatprep.subr.mxu0 0.0
        %525 = vmatpush1.msra.mxu0 0.0
        %526 = vmatprep.subr.mxu0 0.0
        %527 = vmatpush1.msra.mxu0 0.0
        %528 = vmatprep.subr.mxu0 0.0
        %529 = vmatpush1.msra.mxu0 0.0
        %530 = vmatprep.subr.mxu0 0.0
        %531 = vmatpush1.msra.mxu0 0.0
        %532 = vmatprep.subr.mxu0 0.0
        %533 = vmatpush1.msra.mxu0 0.0
        %534 = vmatprep.subr.mxu0 0.0
        %535 = vmatpush1.msra.mxu0 0.0
        %536 = vmatprep.subr.mxu0 %v510
        %537 = vmatpush1.msra.mxu0 %v508
        %538 = vmatprep.subr.mxu0 %v487
        %539 = vmatpush1.msra.mxu0 %v486
        %540 = vmatprep.subr.mxu0 %v484
        %541 = vmatpush1.msra.mxu0 %v483
        %542 = vmatprep.subr.mxu0 %v481
        %543 = vmatpush1.msra.mxu0 %v480
        %544 = vmatprep.subr.mxu0 %v478
        %545 = vmatpush1.msra.mxu0 %v477
        %546 = vmatprep.subr.mxu0 0.0
        %547 = vmatpush2.msra.mxu0 0.0
        %548 = vmatprep.subr.mxu0 0.0
        %549 = vmatpush2.msra.mxu0 0.0
        %550 = vmatprep.subr.mxu0 0.0
        %551 = vmatpush2.msra.mxu0 0.0
        %552 = vmatprep.subr.mxu0 0.0
        %553 = vmatpush2.msra.mxu0 0.0
        %554 = vmatprep.subr.mxu0 0.0
        %555 = vmatpush2.msra.mxu0 0.0
        %556 = vmatprep.subr.mxu0 0.0
        %557 = vmatpush2.msra.mxu0 0.0
        %558 = vmatprep.subr.mxu0 0.0
        %559 = vmatpush2.msra.mxu0 0.0
        %560 = vmatprep.subr.mxu0 0.0
        %561 = vmatpush2.msra.mxu0 0.0
        %562 = vmatprep.subr.mxu0 0.0
        %563 = vmatpush2.msra.mxu0 0.0
        %564 = vmatprep.subr.mxu0 0.0
        %565 = vmatpush2.msra.mxu0 0.0
        %566 = vmatprep.subr.mxu0 0.0
        %567 = vmatpush2.msra.mxu0 0.0
        %568 = vmatprep.subr.mxu0 0.0
        %569 = vmatpush2.msra.mxu0 0.0
        %570 = vmatprep.subr.mxu0 0.0
        %571 = vmatpush2.msra.mxu0 0.0
        %572 = vmatprep.subr.mxu0 0.0
        %573 = vmatpush2.msra.mxu0 0.0
        %574 = vmatprep.subr.mxu0 0.0
        %575 = vmatpush2.msra.mxu0 0.0
        %576 = vmatprep.subr.mxu0 0.0
        %577 = vmatpush2.msra.mxu0 0.0
        %578 = vmatprep.mubr.f32.mxu0 0.0
        %579 = vmatmul.mubr.f32.gmra.mxu0 %v506
        %v580 = vpop.f32.mrf.mxu0
        %v581 = vadd.f32 0.0, %v580
        %v582 = vpop.f32.mrf.mxu0
        %v583 = vadd.f32 0.0, %v582
        %584 = vdwg.mxu0
        %585 = vmatprep.subr.mxu0 0.0
        %586 = vmatpush1.msra.mxu0 0.0
        %587 = vmatprep.subr.mxu0 0.0
        %588 = vmatpush1.msra.mxu0 0.0
        %589 = vmatprep.subr.mxu0 0.0
        %590 = vmatpush1.msra.mxu0 0.0
        %591 = vmatprep.subr.mxu0 0.0
        %592 = vmatpush1.msra.mxu0 0.0
        %593 = vmatprep.subr.mxu0 0.0
        %594 = vmatpush1.msra.mxu0 0.0
        %595 = vmatprep.subr.mxu0 0.0
        %596 = vmatpush1.msra.mxu0 0.0
        %597 = vmatprep.subr.mxu0 0.0
        %598 = vmatpush1.msra.mxu0 0.0
        %599 = vmatprep.subr.mxu0 0.0
        %600 = vmatpush1.msra.mxu0 0.0
        %601 = vmatprep.subr.mxu0 0.0
        %602 = vmatpush1.msra.mxu0 0.0
        %603 = vmatprep.subr.mxu0 0.0
        %604 = vmatpush1.msra.mxu0 0.0
        %605 = vmatprep.subr.mxu0 0.0
        %606 = vmatpush1.msra.mxu0 0.0
        %607 = vmatprep.subr.mxu0 0.0
        %608 = vmatpush1.msra.mxu0 %v512
        %609 = vmatprep.subr.mxu0 0.0
        %610 = vmatpush1.msra.mxu0 %v488
        %611 = vmatprep.subr.mxu0 0.0
        %612 = vmatpush1.msra.mxu0 %v485
        %613 = vmatprep.subr.mxu0 0.0
        %614 = vmatpush1.msra.mxu0 %v482
        %615 = vmatprep.subr.mxu0 0.0
        %616 = vmatpush1.msra.mxu0 %v479
        %617 = vmatprep.subr.mxu0 0.0
        %618 = vmatpush2.msra.mxu0 0.0
        %619 = vmatprep.subr.mxu0 0.0
        %620 = vmatpush2.msra.mxu0 0.0
        %621 = vmatprep.subr.mxu0 0.0
        %622 = vmatpush2.msra.mxu0 0.0
        %623 = vmatprep.subr.mxu0 0.0
        %624 = vmatpush2.msra.mxu0 0.0
        %625 = vmatprep.subr.mxu0 0.0
        %626 = vmatpush2.msra.mxu0 0.0
        %627 = vmatprep.subr.mxu0 0.0
        %628 = vmatpush2.msra.mxu0 0.0
        %629 = vmatprep.subr.mxu0 0.0
        %630 = vmatpush2.msra.mxu0 0.0
        %631 = vmatprep.subr.mxu0 0.0
        %632 = vmatpush2.msra.mxu0 0.0
        %633 = vmatprep.subr.mxu0 0.0
        %634 = vmatpush2.msra.mxu0 0.0
        %635 = vmatprep.subr.mxu0 0.0
        %636 = vmatpush2.msra.mxu0 0.0
        %637 = vmatprep.subr.mxu0 0.0
        %638 = vmatpush2.msra.mxu0 0.0
        %639 = vmatprep.subr.mxu0 0.0
        %640 = vmatpush2.msra.mxu0 0.0
        %641 = vmatprep.subr.mxu0 0.0
        %642 = vmatpush2.msra.mxu0 0.0
        %643 = vmatprep.subr.mxu0 0.0
        %644 = vmatpush2.msra.mxu0 0.0
        %645 = vmatprep.subr.mxu0 0.0
        %646 = vmatpush2.msra.mxu0 0.0
        %647 = vmatprep.subr.mxu0 0.0
        %648 = vmatpush2.msra.mxu0 0.0
        %649 = vmatprep.mubr.f32.mxu0 0.0
        %650 = vmatmul.mubr.f32.gmra.mxu0 %v506
        %v651 = vpop.f32.mrf.mxu0
        %v652 = vadd.f32 0.0, %v651
        %v653 = vpop.f32.mrf.mxu0
        %654 = vdwg.mxu0
        %v655 = vrot.slane %v581, 4
        %v656 = vadd.f32 %v581, %v655
        %v657 = vrot.slane %v656, 2
        %v658 = vadd.f32 %v656, %v657
        %v659 = vrot.slane %v658, 1
        %v660 = vadd.f32 %v658, %v659
        %v661 = vrot.slane %v583, 4
        %v662 = vadd.f32 %v583, %v661
        %v663 = vrot.slane %v662, 2
        %v664 = vadd.f32 %v662, %v663
        %v665 = vrot.slane %v664, 1
        %v666 = vadd.f32 %v664, %v665
        %v667 = vrot.slane %v652, 4
        %v668 = vadd.f32 %v652, %v667
        %v669 = vrot.slane %v668, 2
        %v670 = vadd.f32 %v668, %v669
        %v671 = vrot.slane %v670, 1
        %v672 = vadd.f32 %v670, %v671
        %v673 = vrcp.pop 8.0
        %v674 = vmul.f32 %v660, %v673
        %v675 = vmul.f32 %v666, %v673
        %v676 = vmul.f32 %v672, %v673
        %v677 = vsub.f32 %v581, %v674
        %v678 = vsub.f32 %v583, %v675
        %v679 = vsub.f32 %v652, %v676
        %v680 = vmul.f32 %v677, %v677
        %v681 = vmul.f32 %v678, %v678
        %v682 = vmul.f32 %v679, %v679
        %v683 = vrot.slane %v680, 4
        %v684 = vadd.f32 %v680, %v683
        %v685 = vrot.slane %v684, 2
        %v686 = vadd.f32 %v684, %v685
        %v687 = vrot.slane %v686, 1
        %v688 = vadd.f32 %v686, %v687
        %v689 = vrot.slane %v681, 4
        %v690 = vadd.f32 %v681, %v689
        %v691 = vrot.slane %v690, 2
        %v692 = vadd.f32 %v690, %v691
        %v693 = vrot.slane %v692, 1
        %v694 = vadd.f32 %v692, %v693
        %v695 = vrot.slane %v682, 4
        %v696 = vadd.f32 %v682, %v695
        %v697 = vrot.slane %v696, 2
        %v698 = vadd.f32 %v696, %v697
        %v699 = vrot.slane %v698, 1
        %v700 = vadd.f32 %v698, %v699
        %v701 = vmul.f32 %v688, %v673
        %v702 = vmul.f32 %v694, %v673
        %v703 = vmul.f32 %v700, %v673
        %v704 = vadd.f32 %v701, 1e-06
        %v705 = vadd.f32 %v702, 1e-06
        %v706 = vadd.f32 %v703, 1e-06
        %v707 = vrsqrt.pop %v704
        %v708 = vrsqrt.pop %v705
        %v709 = vrsqrt.pop %v706
        %v710 = vmul.f32 %v677, %v707
        %v711 = vmul.f32 %v678, %v708
        %v712 = vmul.f32 %v679, %v709
        %714 = vset.pattern.permute.xlu0 0
        %715 = vperm.xlu0 %714, %v257
        %v716 = vpop.permute.xlu0 %715
        %v718 = vmul.f32 %v710, %v716
        %v719 = vmul.f32 %v711, %v716
        %v720 = vmul.f32 %v712, %v716
        %721 = vset.pattern.permute.xlu0 1
        %722 = vperm.xlu0 %721, %v257
        %v723 = vpop.permute.xlu0 %722
        %v725 = vadd.f32 %v718, %v723
        %v726 = vadd.f32 %v719, %v723
        %v727 = vadd.f32 %v720, %v723
        %v728 = vmax.f32 %v725, 0.0
        %v729 = vmax.f32 %v726, 0.0
        %v730 = vmax.f32 %v727, 0.0
        %v732 = vlaneseq
        %v733 = vshrl.u32 %v732, 7
        %v734 = vsub.s32 0, %v733
        %v735 = vrot.slane %v256, %v734
        %v736 = vlaneseq
        %v737 = vshrl.u32 %v736, 7
        %v738 = vsub.s32 1, %v737
        %v739 = vrot.slane %v256, %v738
        %v740 = vlaneseq
        %v741 = vshrl.u32 %v740, 7
        %v742 = vsub.s32 2, %v741
        %v743 = vrot.slane %v256, %v742
        %v747 = vmul.f32 %v728, %v735
        %v748 = vmul.f32 %v729, %v739
        %v749 = vmul.f32 %v730, %v743
        %750 = vst [vmem:[#allocation2 + $0x8] sm:$0xff] %v747
        %751 = vst [vmem:[#allocation2 + $0x10] sm:$0xff] %v748
        %752 = vst [vmem:[#allocation2 + $0x18] sm:$0xff] %v749
        %v753 = vld [vmem:[#allocation2] sm:$0xff]
        %v754 = vld [vmem:[#allocation2 + $0x8] sm:$0xff]
        %v755 = vld [vmem:[#allocation2 + $0x10] sm:$0xff]
        %v756 = vld [vmem:[#allocation2 + $0x18] sm:$0xff]
        %v757 = vld [vmem:[#allocation2 + $0x8] sm:$0xff]
        %v758 = vld [vmem:[#allocation2 + $0x10] sm:$0xff]
        %v759 = vld [vmem:[#allocation2 + $0x18] sm:$0xff]
        %v760 = vld [vmem:[#allocation2 + $0x20] sm:$0xff]
        %765 = vrot.lane.b32.xlu0 %v753, 127
        %v766 = vpop.permute.xlu0 %765
        %767 = vrot.lane.b32.xlu0 %v754, 127
        %v768 = vpop.permute.xlu0 %767
        %769 = vrot.lane.b32.xlu0 %v755, 127
        %v770 = vpop.permute.xlu0 %769
        %771 = vrot.lane.b32.xlu0 %v756, 127
        %v772 = vpop.permute.xlu0 %771
        %v773 = vsel %vm280, %v766, %v768
        %v774 = vsel %vm280, %v768, %v770
        %v775 = vsel %vm280, %v770, %v772
        %776 = vrot.lane.b32.xlu0 %v753, 126
        %v777 = vpop.permute.xlu0 %776
        %778 = vrot.lane.b32.xlu0 %v754, 126
        %v779 = vpop.permute.xlu0 %778
        %780 = vrot.lane.b32.xlu0 %v755, 126
        %v781 = vpop.permute.xlu0 %780
        %782 = vrot.lane.b32.xlu0 %v756, 126
        %v783 = vpop.permute.xlu0 %782
        %v784 = vsel %vm296, %v777, %v779
        %v785 = vsel %vm296, %v779, %v781
        %v786 = vsel %vm296, %v781, %v783
        %787 = vrot.lane.b32.xlu0 %v753, 110
        %v788 = vpop.permute.xlu0 %787
        %789 = vrot.lane.b32.xlu0 %v754, 110
        %v790 = vpop.permute.xlu0 %789
        %791 = vrot.lane.b32.xlu0 %v755, 110
        %v792 = vpop.permute.xlu0 %791
        %793 = vrot.lane.b32.xlu0 %v756, 110
        %v794 = vpop.permute.xlu0 %793
        %v795 = vsel %vm312, %v788, %v790
        %v796 = vsel %vm312, %v790, %v792
        %v797 = vsel %vm312, %v792, %v794
        %798 = vrot.lane.b32.xlu0 %v754, 109
        %v799 = vpop.permute.xlu0 %798
        %800 = vrot.lane.b32.xlu0 %v755, 109
        %v801 = vpop.permute.xlu0 %800
        %802 = vrot.lane.b32.xlu0 %v756, 109
        %v803 = vpop.permute.xlu0 %802
        %v804 = vsel %vm329, %v799, %v801
        %v805 = vsel %vm329, %v801, %v803
        %810 = vrot.lane.b32.xlu0 %v757, 108
        %v811 = vpop.permute.xlu0 %810
        %812 = vrot.lane.b32.xlu0 %v758, 108
        %v813 = vpop.permute.xlu0 %812
        %814 = vrot.lane.b32.xlu0 %v759, 108
        %v815 = vpop.permute.xlu0 %814
        %816 = vrot.lane.b32.xlu0 %v760, 108
        %v817 = vpop.permute.xlu0 %816
        %v818 = vsel %vm348, %v811, %v813
        %v819 = vsel %vm348, %v813, %v815
        %v820 = vsel %vm348, %v815, %v817
        %821 = vrot.lane.b32.xlu0 %v757, 92
        %v822 = vpop.permute.xlu0 %821
        %823 = vrot.lane.b32.xlu0 %v758, 92
        %v824 = vpop.permute.xlu0 %823
        %825 = vrot.lane.b32.xlu0 %v759, 92
        %v826 = vpop.permute.xlu0 %825
        %827 = vrot.lane.b32.xlu0 %v760, 92
        %v828 = vpop.permute.xlu0 %827
        %v829 = vsel %vm366, %v822, %v824
        %v830 = vsel %vm366, %v824, %v826
        %v831 = vsel %vm366, %v826, %v828
        %832 = vrot.lane.b32.xlu0 %v757, 91
        %v833 = vpop.permute.xlu0 %832
        %834 = vrot.lane.b32.xlu0 %v758, 91
        %v835 = vpop.permute.xlu0 %834
        %836 = vrot.lane.b32.xlu0 %v759, 91
        %v837 = vpop.permute.xlu0 %836
        %838 = vrot.lane.b32.xlu0 %v760, 91
        %v839 = vpop.permute.xlu0 %838
        %v840 = vsel %vm382, %v833, %v835
        %v841 = vsel %vm382, %v835, %v837
        %v842 = vsel %vm382, %v837, %v839
        %843 = vrot.lane.b32.xlu0 %v757, 90
        %v844 = vpop.permute.xlu0 %843
        %845 = vrot.lane.b32.xlu0 %v758, 90
        %v846 = vpop.permute.xlu0 %845
        %847 = vrot.lane.b32.xlu0 %v759, 90
        %v848 = vpop.permute.xlu0 %847
        %849 = vrot.lane.b32.xlu0 %v760, 90
        %v850 = vpop.permute.xlu0 %849
        %v851 = vsel %vm398, %v844, %v846
        %v852 = vsel %vm398, %v846, %v848
        %v853 = vsel %vm398, %v848, %v850
        %v854 = vld [vmem:[#allocation6] sm:$0xff]
        %855 = vrot.lane.b32.xlu0 %v753, 19
        %v856 = vpop.permute.xlu0 %855
        %857 = vrot.lane.b32.xlu0 %v754, 19
        %v858 = vpop.permute.xlu0 %857
        %859 = vrot.lane.b32.xlu0 %v755, 19
        %v860 = vpop.permute.xlu0 %859
        %861 = vrot.lane.b32.xlu0 %v756, 19
        %v862 = vpop.permute.xlu0 %861
        %863 = vrot.lane.b32.xlu0 %v773, 19
        %v864 = vpop.permute.xlu0 %863
        %865 = vrot.lane.b32.xlu0 %v774, 19
        %v866 = vpop.permute.xlu0 %865
        %867 = vrot.lane.b32.xlu0 %v775, 19
        %v868 = vpop.permute.xlu0 %867
        %869 = vrot.lane.b32.xlu0 %v772, 19
        %v870 = vpop.permute.xlu0 %869
        %871 = vrot.lane.b32.xlu0 %v784, 19
        %v872 = vpop.permute.xlu0 %871
        %873 = vrot.lane.b32.xlu0 %v785, 19
        %v874 = vpop.permute.xlu0 %873
        %875 = vrot.lane.b32.xlu0 %v786, 19
        %v876 = vpop.permute.xlu0 %875
        %877 = vrot.lane.b32.xlu0 %v783, 19
        %v878 = vpop.permute.xlu0 %877
        %879 = vrot.lane.b32.xlu0 %v795, 19
        %v880 = vpop.permute.xlu0 %879
        %881 = vrot.lane.b32.xlu0 %v796, 19
        %v882 = vpop.permute.xlu0 %881
        %883 = vrot.lane.b32.xlu0 %v797, 19
        %v884 = vpop.permute.xlu0 %883
        %885 = vrot.lane.b32.xlu0 %v794, 19
        %v886 = vpop.permute.xlu0 %885
        %887 = vrot.lane.b32.xlu0 %v799, 19
        %v888 = vpop.permute.xlu0 %887
        %889 = vrot.lane.b32.xlu0 %v804, 19
        %v890 = vpop.permute.xlu0 %889
        %891 = vrot.lane.b32.xlu0 %v805, 19
        %v892 = vpop.permute.xlu0 %891
        %893 = vrot.lane.b32.xlu0 %v803, 19
        %v894 = vpop.permute.xlu0 %893
        %895 = vrot.lane.b32.xlu0 %v811, 19
        %v896 = vpop.permute.xlu0 %895
        %897 = vrot.lane.b32.xlu0 %v818, 19
        %v898 = vpop.permute.xlu0 %897
        %899 = vrot.lane.b32.xlu0 %v819, 19
        %v900 = vpop.permute.xlu0 %899
        %901 = vrot.lane.b32.xlu0 %v820, 19
        %v902 = vpop.permute.xlu0 %901
        %903 = vrot.lane.b32.xlu0 %v822, 19
        %v904 = vpop.permute.xlu0 %903
        %905 = vrot.lane.b32.xlu0 %v829, 19
        %v906 = vpop.permute.xlu0 %905
        %907 = vrot.lane.b32.xlu0 %v830, 19
        %v908 = vpop.permute.xlu0 %907
        %909 = vrot.lane.b32.xlu0 %v831, 19
        %v910 = vpop.permute.xlu0 %909
        %911 = vrot.lane.b32.xlu0 %v833, 19
        %v912 = vpop.permute.xlu0 %911
        %913 = vrot.lane.b32.xlu0 %v840, 19
        %v914 = vpop.permute.xlu0 %913
        %915 = vrot.lane.b32.xlu0 %v841, 19
        %v916 = vpop.permute.xlu0 %915
        %917 = vrot.lane.b32.xlu0 %v842, 19
        %v918 = vpop.permute.xlu0 %917
        %919 = vrot.lane.b32.xlu0 %v844, 19
        %v920 = vpop.permute.xlu0 %919
        %921 = vrot.lane.b32.xlu0 %v851, 19
        %v922 = vpop.permute.xlu0 %921
        %923 = vrot.lane.b32.xlu0 %v852, 19
        %v924 = vpop.permute.xlu0 %923
        %925 = vrot.lane.b32.xlu0 %v853, 19
        %v926 = vpop.permute.xlu0 %925
        %v927 = vsel %vm476, %v856, %v858
        %v928 = vsel %vm476, %v858, %v860
        %v929 = vsel %vm476, %v860, %v862
        %v930 = vsel %vm476, %v864, %v866
        %v931 = vsel %vm476, %v866, %v868
        %v932 = vsel %vm476, %v868, %v870
        %v933 = vsel %vm476, %v872, %v874
        %v934 = vsel %vm476, %v874, %v876
        %v935 = vsel %vm476, %v876, %v878
        %v936 = vsel %vm476, %v880, %v882
        %v937 = vsel %vm476, %v882, %v884
        %v938 = vsel %vm476, %v884, %v886
        %v939 = vsel %vm476, %v888, %v890
        %v940 = vsel %vm476, %v890, %v892
        %v941 = vsel %vm476, %v892, %v894
        %v942 = vsel %vm476, %v896, %v898
        %v943 = vsel %vm476, %v898, %v900
        %v944 = vsel %vm476, %v900, %v902
        %v945 = vsel %vm476, %v904, %v906
        %v946 = vsel %vm476, %v906, %v908
        %v947 = vsel %vm476, %v908, %v910
        %v948 = vsel %vm476, %v912, %v914
        %v949 = vsel %vm476, %v914, %v916
        %v950 = vsel %vm476, %v916, %v918
        %v951 = vsel %vm476, %v920, %v922
        %v952 = vsel %vm476, %v922, %v924
        %v953 = vsel %vm476, %v924, %v926
        %vm981 = vcmask 588800
        %v983 = vsel %vm981, %v854, 0
        %985 = vmatprep.subr.mxu0 0.0
        %986 = vmatpush1.msra.mxu0 0.0
        %987 = vmatprep.subr.mxu0 0.0
        %988 = vmatpush1.msra.mxu0 0.0
        %989 = vmatprep.subr.mxu0 0.0
        %990 = vmatpush1.msra.mxu0 0.0
        %991 = vmatprep.subr.mxu0 0.0
        %992 = vmatpush1.msra.mxu0 0.0
        %993 = vmatprep.subr.mxu0 0.0
        %994 = vmatpush1.msra.mxu0 0.0
        %995 = vmatprep.subr.mxu0 0.0
        %996 = vmatpush1.msra.mxu0 0.0
        %997 = vmatprep.subr.mxu0 0.0
        %998 = vmatpush1.msra.mxu0 0.0
        %999 = vmatprep.subr.mxu0 %v952
        %1000 = vmatpush1.msra.mxu0 %v951
        %1001 = vmatprep.subr.mxu0 %v949
        %1002 = vmatpush1.msra.mxu0 %v948
        %1003 = vmatprep.subr.mxu0 %v946
        %1004 = vmatpush1.msra.mxu0 %v945
        %1005 = vmatprep.subr.mxu0 %v943
        %1006 = vmatpush1.msra.mxu0 %v942
        %1007 = vmatprep.subr.mxu0 %v940
        %1008 = vmatpush1.msra.mxu0 %v939
        %1009 = vmatprep.subr.mxu0 %v937
        %1010 = vmatpush1.msra.mxu0 %v936
        %1011 = vmatprep.subr.mxu0 %v934
        %1012 = vmatpush1.msra.mxu0 %v933
        %1013 = vmatprep.subr.mxu0 %v931
        %1014 = vmatpush1.msra.mxu0 %v930
        %1015 = vmatprep.subr.mxu0 %v928
        %1016 = vmatpush1.msra.mxu0 %v927
        %1017 = vmatprep.subr.mxu0 0.0
        %1018 = vmatpush2.msra.mxu0 0.0
        %1019 = vmatprep.subr.mxu0 0.0
        %1020 = vmatpush2.msra.mxu0 0.0
        %1021 = vmatprep.subr.mxu0 0.0
        %1022 = vmatpush2.msra.mxu0 0.0
        %1023 = vmatprep.subr.mxu0 0.0
        %1024 = vmatpush2.msra.mxu0 0.0
        %1025 = vmatprep.subr.mxu0 0.0
        %1026 = vmatpush2.msra.mxu0 0.0
        %1027 = vmatprep.subr.mxu0 0.0
        %1028 = vmatpush2.msra.mxu0 0.0
        %1029 = vmatprep.subr.mxu0 0.0
        %1030 = vmatpush2.msra.mxu0 0.0
        %1031 = vmatprep.subr.mxu0 0.0
        %1032 = vmatpush2.msra.mxu0 0.0
        %1033 = vmatprep.subr.mxu0 0.0
        %1034 = vmatpush2.msra.mxu0 0.0
        %1035 = vmatprep.subr.mxu0 0.0
        %1036 = vmatpush2.msra.mxu0 0.0
        %1037 = vmatprep.subr.mxu0 0.0
        %1038 = vmatpush2.msra.mxu0 0.0
        %1039 = vmatprep.subr.mxu0 0.0
        %1040 = vmatpush2.msra.mxu0 0.0
        %1041 = vmatprep.subr.mxu0 0.0
        %1042 = vmatpush2.msra.mxu0 0.0
        %1043 = vmatprep.subr.mxu0 0.0
        %1044 = vmatpush2.msra.mxu0 0.0
        %1045 = vmatprep.subr.mxu0 0.0
        %1046 = vmatpush2.msra.mxu0 0.0
        %1047 = vmatprep.subr.mxu0 0.0
        %1048 = vmatpush2.msra.mxu0 0.0
        %1049 = vmatprep.mubr.f32.mxu0 0.0
        %1050 = vmatmul.mubr.f32.gmra.mxu0 %v983
        %v1051 = vpop.f32.mrf.mxu0
        %v1052 = vadd.f32 0.0, %v1051
        %v1053 = vpop.f32.mrf.mxu0
        %v1054 = vadd.f32 0.0, %v1053
        %1055 = vdwg.mxu0
        %1056 = vmatprep.subr.mxu0 0.0
        %1057 = vmatpush1.msra.mxu0 0.0
        %1058 = vmatprep.subr.mxu0 0.0
        %1059 = vmatpush1.msra.mxu0 0.0
        %1060 = vmatprep.subr.mxu0 0.0
        %1061 = vmatpush1.msra.mxu0 0.0
        %1062 = vmatprep.subr.mxu0 0.0
        %1063 = vmatpush1.msra.mxu0 0.0
        %1064 = vmatprep.subr.mxu0 0.0
        %1065 = vmatpush1.msra.mxu0 0.0
        %1066 = vmatprep.subr.mxu0 0.0
        %1067 = vmatpush1.msra.mxu0 0.0
        %1068 = vmatprep.subr.mxu0 0.0
        %1069 = vmatpush1.msra.mxu0 0.0
        %1070 = vmatprep.subr.mxu0 0.0
        %1071 = vmatpush1.msra.mxu0 %v953
        %1072 = vmatprep.subr.mxu0 0.0
        %1073 = vmatpush1.msra.mxu0 %v950
        %1074 = vmatprep.subr.mxu0 0.0
        %1075 = vmatpush1.msra.mxu0 %v947
        %1076 = vmatprep.subr.mxu0 0.0
        %1077 = vmatpush1.msra.mxu0 %v944
        %1078 = vmatprep.subr.mxu0 0.0
        %1079 = vmatpush1.msra.mxu0 %v941
        %1080 = vmatprep.subr.mxu0 0.0
        %1081 = vmatpush1.msra.mxu0 %v938
        %1082 = vmatprep.subr.mxu0 0.0
        %1083 = vmatpush1.msra.mxu0 %v935
        %1084 = vmatprep.subr.mxu0 0.0
        %1085 = vmatpush1.msra.mxu0 %v932
        %1086 = vmatprep.subr.mxu0 0.0
        %1087 = vmatpush1.msra.mxu0 %v929
        %1088 = vmatprep.subr.mxu0 0.0
        %1089 = vmatpush2.msra.mxu0 0.0
        %1090 = vmatprep.subr.mxu0 0.0
        %1091 = vmatpush2.msra.mxu0 0.0
        %1092 = vmatprep.subr.mxu0 0.0
        %1093 = vmatpush2.msra.mxu0 0.0
        %1094 = vmatprep.subr.mxu0 0.0
        %1095 = vmatpush2.msra.mxu0 0.0
        %1096 = vmatprep.subr.mxu0 0.0
        %1097 = vmatpush2.msra.mxu0 0.0
        %1098 = vmatprep.subr.mxu0 0.0
        %1099 = vmatpush2.msra.mxu0 0.0
        %1100 = vmatprep.subr.mxu0 0.0
        %1101 = vmatpush2.msra.mxu0 0.0
        %1102 = vmatprep.subr.mxu0 0.0
        %1103 = vmatpush2.msra.mxu0 0.0
        %1104 = vmatprep.subr.mxu0 0.0
        %1105 = vmatpush2.msra.mxu0 0.0
        %1106 = vmatprep.subr.mxu0 0.0
        %1107 = vmatpush2.msra.mxu0 0.0
        %1108 = vmatprep.subr.mxu0 0.0
        %1109 = vmatpush2.msra.mxu0 0.0
        %1110 = vmatprep.subr.mxu0 0.0
        %1111 = vmatpush2.msra.mxu0 0.0
        %1112 = vmatprep.subr.mxu0 0.0
        %1113 = vmatpush2.msra.mxu0 0.0
        %1114 = vmatprep.subr.mxu0 0.0
        %1115 = vmatpush2.msra.mxu0 0.0
        %1116 = vmatprep.subr.mxu0 0.0
        %1117 = vmatpush2.msra.mxu0 0.0
        %1118 = vmatprep.subr.mxu0 0.0
        %1119 = vmatpush2.msra.mxu0 0.0
        %1120 = vmatprep.mubr.f32.mxu0 0.0
        %1121 = vmatmul.mubr.f32.gmra.mxu0 %v983
        %v1122 = vpop.f32.mrf.mxu0
        %v1123 = vadd.f32 0.0, %v1122
        %v1124 = vpop.f32.mrf.mxu0
        %1125 = vdwg.mxu0
        %v1126 = vrot.slane %v1052, 4
        %v1127 = vadd.f32 %v1052, %v1126
        %v1128 = vrot.slane %v1127, 2
        %v1129 = vadd.f32 %v1127, %v1128
        %v1130 = vrot.slane %v1129, 1
        %v1131 = vadd.f32 %v1129, %v1130
        %v1132 = vrot.slane %v1054, 4
        %v1133 = vadd.f32 %v1054, %v1132
        %v1134 = vrot.slane %v1133, 2
        %v1135 = vadd.f32 %v1133, %v1134
        %v1136 = vrot.slane %v1135, 1
        %v1137 = vadd.f32 %v1135, %v1136
        %v1138 = vrot.slane %v1123, 4
        %v1139 = vadd.f32 %v1123, %v1138
        %v1140 = vrot.slane %v1139, 2
        %v1141 = vadd.f32 %v1139, %v1140
        %v1142 = vrot.slane %v1141, 1
        %v1143 = vadd.f32 %v1141, %v1142
        %v1144 = vmul.f32 %v1131, %v673
        %v1145 = vmul.f32 %v1137, %v673
        %v1146 = vmul.f32 %v1143, %v673
        %v1147 = vsub.f32 %v1052, %v1144
        %v1148 = vsub.f32 %v1054, %v1145
        %v1149 = vsub.f32 %v1123, %v1146
        %v1150 = vmul.f32 %v1147, %v1147
        %v1151 = vmul.f32 %v1148, %v1148
        %v1152 = vmul.f32 %v1149, %v1149
        %v1153 = vrot.slane %v1150, 4
        %v1154 = vadd.f32 %v1150, %v1153
        %v1155 = vrot.slane %v1154, 2
        %v1156 = vadd.f32 %v1154, %v1155
        %v1157 = vrot.slane %v1156, 1
        %v1158 = vadd.f32 %v1156, %v1157
        %v1159 = vrot.slane %v1151, 4
        %v1160 = vadd.f32 %v1151, %v1159
        %v1161 = vrot.slane %v1160, 2
        %v1162 = vadd.f32 %v1160, %v1161
        %v1163 = vrot.slane %v1162, 1
        %v1164 = vadd.f32 %v1162, %v1163
        %v1165 = vrot.slane %v1152, 4
        %v1166 = vadd.f32 %v1152, %v1165
        %v1167 = vrot.slane %v1166, 2
        %v1168 = vadd.f32 %v1166, %v1167
        %v1169 = vrot.slane %v1168, 1
        %v1170 = vadd.f32 %v1168, %v1169
        %v1171 = vmul.f32 %v1158, %v673
        %v1172 = vmul.f32 %v1164, %v673
        %v1173 = vmul.f32 %v1170, %v673
        %v1174 = vadd.f32 %v1171, 1e-06
        %v1175 = vadd.f32 %v1172, 1e-06
        %v1176 = vadd.f32 %v1173, 1e-06
        %v1177 = vrsqrt.pop %v1174
        %v1178 = vrsqrt.pop %v1175
        %v1179 = vrsqrt.pop %v1176
        %v1180 = vmul.f32 %v1147, %v1177
        %v1181 = vmul.f32 %v1148, %v1178
        %v1182 = vmul.f32 %v1149, %v1179
        %1183 = vset.pattern.permute.xlu0 2
        %1184 = vperm.xlu0 %1183, %v257
        %v1185 = vpop.permute.xlu0 %1184
        %v1187 = vmul.f32 %v1180, %v1185
        %v1188 = vmul.f32 %v1181, %v1185
        %v1189 = vmul.f32 %v1182, %v1185
        %1190 = vset.pattern.permute.xlu0 3
        %1191 = vperm.xlu0 %1190, %v257
        %v1192 = vpop.permute.xlu0 %1191
        %v1194 = vadd.f32 %v1187, %v1192
        %v1195 = vadd.f32 %v1188, %v1192
        %v1196 = vadd.f32 %v1189, %v1192
        %v1197 = vmax.f32 %v1194, 0.0
        %v1198 = vmax.f32 %v1195, 0.0
        %v1199 = vmax.f32 %v1196, 0.0
        %v1200 = vmul.f32 %v1197, %v735
        %v1201 = vmul.f32 %v1198, %v739
        %v1202 = vmul.f32 %v1199, %v743
        %1203 = vst [vmem:[%s253] sm:$0xff] %v1200
        %1204 = vst [vmem:[%s253 + $0x8] sm:$0xff] %v1201
        %1205 = vst [vmem:[%s253 + $0x10] sm:$0xff] %v1202
        %s1206 = sand.u32 %s141, 1
        %s1207 = scalar_lea.sflag [#allocation5], %s1206
        %s1208 = sand.u32 %s141, 1
        %s1209 = smul.addr %s1208, 24
        %s1210 = scalar_lea.vmem [#allocation8], %s1209
        // Predicated region
        $region49: #{tpu_custom_call.1} parent=39 // pred_check
          %p1211 = pneg %p151
        $region50: #{tpu_custom_call.1} parent=39 // pred_check_branch
          %1213 = sbr.rel (%p1211) target = $region52
        $region51: #{tpu_custom_call.1} parent=39 // pred_region
          %s1215 = ssub.s32 384, 384
          %1216 = vsyncadd %s1207, %s1215
          %s1217 = smul.addr %s23, 3
          %s1218 = smul.addr %s1217, 128
          %s1219 = scalar_lea.hbm %s5, %s1218
          %s1221 = sshll.u32 %s1210, 4
          %s1222 = int_to_ptr.vmem [resolvable:$true] %s1221
          %1224 = dma.vmem_to_hbm [thread:$0]  %s1222, 384, %s1219, %s1207
        $region52: #{tpu_custom_call.1} parent=39 // pred_fallthru
          _
      $region40: #{tpu_custom_call.1} parent=5 // pred_fallthru
        _
      %p1225 = scmp.le.s32.totalorder 2, %s18
      // Predicated region
      $region53: #{tpu_custom_call.1} parent=5 // pred_check
        %p1226 = pneg %p1225
      $region54: #{tpu_custom_call.1} parent=5 // pred_check_branch
        %1228 = sbr.rel (%p1226) target = $region56
      $region55: #{tpu_custom_call.1} parent=5 // pred_region
        %s1229 = ssub.s32 %s18, 2
        // Predicated region
        $region57: #{tpu_custom_call.1} parent=55 // pred_check
          %p1230 = pneg %p157
        $region58: #{tpu_custom_call.1} parent=55 // pred_check_branch
          %1232 = sbr.rel (%p1230) target = $region60
        $region59: #{tpu_custom_call.1} parent=55 // pred_region
          %s1233 = sand.u32 %s142, 1
          %s1234 = scalar_lea.sflag [#allocation5], %s1233
          %s1235 = sand.u32 %s142, 1
          %s1236 = smul.addr %s1235, 24
          %s1237 = scalar_lea.vmem [#allocation8], %s1236
          %1238 = dma.done %s1234, 384
        $region60: #{tpu_custom_call.1} parent=55 // pred_fallthru
          _
      $region56: #{tpu_custom_call.1} parent=5 // pred_fallthru
        _
    $region6: #{tpu_custom_call.1} parent=1 // loop_footer
      %s22 = sadd.s32 1, %s18
    $region7: #{tpu_custom_call.1} parent=1 // loop_footer_branch
      %17 = sbr.rel target = $region3
    $region8: #{tpu_custom_call.1} parent=1 // loop_exit
      _
    %1239 = vsyncpa [#allocation4], 1
    %s1240 = scalar_lea.sflag [#allocation4], 1
    %1241 = vsyncpa %s1240, 1
    %1242 = vsyncpa [#allocation7], 1
    %1243 = vsyncpa [#allocation5], 1
    %s1244 = scalar_lea.sflag [#allocation5], 1
    %1245 = vsyncpa %s1244, 1

</llo_original>
